<compile_context>
chip_gen: v7x
topology: tpu7x:2x2x1
jax: 0.10.0
libtpu: 0.0.40
codegen_flags: <defaults>
</compile_context>

<pallas_src>
import functools

import jax
import jax.numpy as jnp
from jax import lax
from jax.experimental import pallas as pl
from jax.experimental.pallas import tpu as pltpu


# ---------------------------------------------------------------------------
# Pallas kernel: logits = x @ W.T + b ; probs = softmax(logits) ;
#                keep[t, e] = 1 iff expert e is in token t's top-p set.
# ---------------------------------------------------------------------------
def _router_kernel(x_ref, w_ref, b_ref, logits_ref, probs_ref, keep_ref, *,
                   threshold):
    x = x_ref[...]                          # (tm, d_model)
    w = w_ref[...]                          # (num_experts, d_model) native layout

    # logits = x @ W.T + b  (MXU, f32 accumulate); W consumed without transpose.
    logits = lax.dot_general(
        x, w,
        dimension_numbers=(((1,), (1,)), ((), ())),
        preferred_element_type=jnp.float32,
    ) + b_ref[...]                          # (tm, E) f32
    logits_ref[...] = logits.astype(logits_ref.dtype)

    # Softmax in f32; division replaced by the (otherwise idle) EUP reciprocal.
    m = jnp.max(logits, axis=-1, keepdims=True)
    e = jnp.exp(logits - m)
    s = jnp.sum(e, axis=-1, keepdims=True)
    probs_f32 = e * pl.reciprocal(s, approx=True)
    probs_rd = probs_f32.astype(probs_ref.dtype)
    probs_ref[...] = probs_rd

    # Fused top-p keep-mask, emitted in *original* expert order.
    # Tiny selection sort over the (static, small) expert axis: repeatedly
    # extract the largest remaining prob, accumulate the running cumulative
    # sum, keep the expert iff (cumsum <= threshold) or it is the top-1.
    p = probs_rd.astype(jnp.float32)
    num_experts = p.shape[-1]
    lane = lax.broadcasted_iota(jnp.int32, p.shape, 1)
    remaining = p
    csum = jnp.zeros(p.shape[:-1] + (1,), jnp.float32)
    keep = jnp.zeros(p.shape, jnp.bool_)
    thr = jnp.float32(threshold)
    for k in range(num_experts):
        cur = jnp.max(remaining, axis=-1, keepdims=True)
        is_max = remaining == cur
        first = jnp.min(jnp.where(is_max, lane, num_experts), axis=-1,
                        keepdims=True)                 # tie-break: lowest index
        one_hot = lane == first
        csum = csum + cur
        if k == 0:                                     # mask[..., 0] = 1
            sel = jnp.ones_like(csum, dtype=jnp.bool_)
        else:
            sel = csum <= thr
        keep = keep | (one_hot & sel)
        remaining = jnp.where(one_hot, jnp.float32(-1.0), remaining)
    keep_ref[...] = keep.astype(keep_ref.dtype)


# ---------------------------------------------------------------------------
# VMEM-budget-aware tile selection (v5e/v6e: 128 MiB, v7x: 64 MiB).
# ---------------------------------------------------------------------------
def _pick_tile_and_vmem_limit(num_tokens, d_model, num_experts, x_itemsize):
    try:
        vmem_cap = int(pltpu.get_tpu_info().vmem_capacity_bytes)
    except Exception:                       # be conservative: assume v7x (64 MiB)
        vmem_cap = 64 * 1024 * 1024
    lane_e = max(num_experts, 128)          # (.., E) buffers pad E up to 128 lanes
    lane_d = max(d_model, 128)

    def need(tm):
        x_buf = 2 * tm * lane_d * x_itemsize            # double-buffered x tile
        w_buf = 2 * max(num_experts, 8) * lane_d * 4    # weight block
        b_buf = 2 * 8 * lane_e * 4                      # bias block
        out_buf = 2 * 3 * tm * lane_e * 4               # logits / probs / keep
        work = 8 * tm * lane_e * 4                      # selection-sort temporaries
        return x_buf + w_buf + b_buf + out_buf + work

    budget = (vmem_cap * 3) // 5                        # leave ~40% headroom
    if num_tokens <= 1024 and need(num_tokens) <= budget:
        tm = num_tokens                                 # single full block
    else:
        tm = None
        for cand in (1024, 512, 256, 128, 64, 32, 16, 8):   # multiples of 8
            if cand < num_tokens and need(cand) <= budget:
                tm = cand
                break
        if tm is None:
            tm = min(num_tokens, 8)
    vmem_limit = min(vmem_cap, max(need(tm) + (8 << 20), 32 << 20))
    return tm, int(vmem_limit)


# ---------------------------------------------------------------------------
# pallas_call wrapper.
# ---------------------------------------------------------------------------
def _router_linear_softmax_topp(x, weight, bias, *, threshold, router_dtype):
    """One fused Pallas call: logits, softmax probs and the top-p keep mask."""
    num_tokens, d_model = x.shape
    num_experts = weight.shape[0]

    x = jnp.asarray(x)
    # Kernel is dtype-agnostic (f32 accumulate); callers may feed bf16 x/W to
    # halve the HBM bytes of the dominant x read.
    w = jnp.asarray(weight).astype(x.dtype)             # native (E, d_model) layout
    b2 = jnp.asarray(bias).reshape(1, num_experts).astype(jnp.float32)

    x_itemsize = jnp.dtype(x.dtype).itemsize
    p_itemsize = jnp.dtype(router_dtype).itemsize
    tm, vmem_limit = _pick_tile_and_vmem_limit(
        num_tokens, d_model, num_experts, x_itemsize)
    grid = (pl.cdiv(num_tokens, tm),)

    cost = pl.CostEstimate(
        flops=2 * num_tokens * d_model * num_experts,
        transcendentals=num_tokens * num_experts,
        bytes_accessed=int(
            num_tokens * d_model * x_itemsize            # x read
            + num_experts * d_model * x_itemsize + num_experts * 4
            + num_tokens * num_experts * (x_itemsize + p_itemsize + 4)),
    )

    kernel = functools.partial(_router_kernel, threshold=float(threshold))
    logits, probs, keep = pl.pallas_call(
        kernel,
        out_shape=(
            jax.ShapeDtypeStruct((num_tokens, num_experts), x.dtype),
            jax.ShapeDtypeStruct((num_tokens, num_experts), router_dtype),
            jax.ShapeDtypeStruct((num_tokens, num_experts), jnp.int32),
        ),
        grid_spec=pltpu.PrefetchScalarGridSpec(
            num_scalar_prefetch=0,
            grid=grid,
            in_specs=[
                pl.BlockSpec((tm, d_model), lambda i: (i, 0)),
                pl.BlockSpec((num_experts, d_model), lambda i: (0, 0)),
                pl.BlockSpec((1, num_experts), lambda i: (0, 0)),
            ],
            out_specs=(
                pl.BlockSpec((tm, num_experts), lambda i: (i, 0)),
                pl.BlockSpec((tm, num_experts), lambda i: (i, 0)),
                pl.BlockSpec((tm, num_experts), lambda i: (i, 0)),
            ),
        ),
        compiler_params=pltpu.CompilerParams(
            dimension_semantics=("parallel",),   # token tiles independent (v7x 2 TCs)
            vmem_limit_bytes=vmem_limit,
        ),
        cost_estimate=cost,
    )(x, w, b2)
    return logits, probs, keep


# ---------------------------------------------------------------------------
# Full forward = kernel + capacity-limited assignment glue (single sort pass).
# ---------------------------------------------------------------------------
def top_p_router_forward(x, weight, bias, *, threshold, expert_capacity,
                         router_dtype=jnp.float32):
    """Replicates TopPRouter.forward.

    Returns (logits, probs, expert_probs, expert_indices).
    """
    num_tokens, _ = x.shape
    num_experts = weight.shape[0]

    logits, probs, keep_i32 = _router_linear_softmax_topp(
        x, weight, bias, threshold=threshold, router_dtype=router_dtype)
    keep = keep_i32 != 0                                 # (N, E) original expert order

    cap = num_tokens if expert_capacity == -1 else expert_capacity
    total = num_tokens * num_experts

    # Single-pass assignment: group kept (token, expert) entries by expert
    # (unkept entries go to a trailing group) with descending prob inside each
    # group, then gather the first `cap` rows of every group.
    flat_keep = keep.reshape(-1)
    flat_probs = probs.reshape(-1)
    flat_expert = jnp.tile(jnp.arange(num_experts, dtype=jnp.int32), num_tokens)
    flat_token = jnp.repeat(jnp.arange(num_tokens, dtype=jnp.int32), num_experts)

    counts = jnp.sum(keep, axis=0).astype(jnp.int32)     # kept tokens per expert
    offsets = jnp.concatenate(
        [jnp.zeros((1,), jnp.int32), jnp.cumsum(counts)[:-1].astype(jnp.int32)])

    group = jnp.where(flat_keep, flat_expert, jnp.int32(num_experts))
    neg_p = jnp.where(flat_keep, -flat_probs.astype(jnp.float32), jnp.inf)
    order = jnp.lexsort((neg_p, group))        # primary: expert group, secondary: -prob
    sorted_probs = flat_probs[order]
    sorted_tok = flat_token[order]

    slot = jnp.arange(cap, dtype=jnp.int32)
    gather_idx = jnp.minimum(offsets[:, None] + slot[None, :], total - 1)  # (E, cap)
    valid = slot[None, :] < jnp.minimum(counts, cap)[:, None]
    expert_probs = jnp.where(valid, sorted_probs[gather_idx],
                             jnp.zeros((), probs.dtype))
    expert_indices = jnp.where(valid, sorted_tok[gather_idx], jnp.int32(-1))
    # TODO(synk): PyTorch returns expert_indices as torch.long (int64); int32 is TPU-native.
    return logits, probs, expert_probs, expert_indices


# ---------------------------------------------------------------------------
# Straightforward per-expert reference for the assignment glue (self-check).
# ---------------------------------------------------------------------------
def _reference_assignment(probs, *, threshold, expert_capacity):
    num_tokens, num_experts = probs.shape
    sorted_idx = jnp.argsort(-probs, axis=-1)
    sorted_p = jnp.take_along_axis(probs, sorted_idx, axis=-1)
    csum = jnp.cumsum(sorted_p.astype(jnp.float32), axis=-1)
    mask = csum <= jnp.float32(threshold)
    mask = mask.at[:, 0].set(True)
    keep = jnp.zeros((num_tokens, num_experts), bool)
    keep = keep.at[jnp.arange(num_tokens)[:, None], sorted_idx].set(mask)
    cap = num_tokens if expert_capacity == -1 else expert_capacity
    k = min(cap, num_tokens)
    ep_rows, ei_rows = [], []
    for e in range(num_experts):
        scores = jnp.where(keep[:, e], probs[:, e].astype(jnp.float32), -jnp.inf)
        vals, tok = jax.lax.top_k(scores, k)
        ok = vals > -jnp.inf
        pr = jnp.where(ok, vals, 0.0).astype(probs.dtype)
        ti = jnp.where(ok, tok.astype(jnp.int32), jnp.int32(-1))
        if k < cap:
            pr = jnp.concatenate([pr, jnp.zeros((cap - k,), probs.dtype)])
            ti = jnp.concatenate([ti, jnp.full((cap - k,), -1, jnp.int32)])
        ep_rows.append(pr)
        ei_rows.append(ti)
    return jnp.stack(ep_rows), jnp.stack(ei_rows)


if __name__ == "__main__":
    key = jax.random.PRNGKey(0)
    d_model = 32
    num_experts = 8
    num_tokens = 16
    expert_capacity = 4
    top_p_threshold = 0.5
    router_dtype = jnp.float32           # router_dtype="float32"

    kw, kb, kx = jax.random.split(key, 3)
    bound = 1.0 / (d_model ** 0.5)       # nn.Linear default init range
    weight = jax.random.uniform(kw, (num_experts, d_model), jnp.float32, -bound, bound)
    bias = jax.random.uniform(kb, (num_experts,), jnp.float32, -bound, bound)
    x = jax.random.normal(kx, (num_tokens, d_model), jnp.float32)

    logits, probs, expert_probs, expert_indices = top_p_router_forward(
        x, weight, bias,
        threshold=top_p_threshold,
        expert_capacity=expert_capacity,
        router_dtype=router_dtype,
    )
    jax.block_until_ready((logits, probs, expert_probs, expert_indices))

    # Shape checks (match the PyTorch module's contract).
    assert logits.shape == (num_tokens, num_experts)
    assert probs.shape == (num_tokens, num_experts)
    assert expert_probs.shape == (num_experts, expert_capacity)
    assert expert_indices.shape == (num_experts, expert_capacity)

    # Numeric self-checks against plain-XLA references.
    ref_logits = x @ weight.T + bias
    assert jnp.allclose(logits, ref_logits, rtol=1e-4, atol=1e-4)
    ref_probs = jax.nn.softmax(ref_logits.astype(router_dtype), axis=-1)
    assert jnp.allclose(probs, ref_probs, rtol=2e-3, atol=2e-3)
    ref_ep, ref_ei = _reference_assignment(
        probs, threshold=top_p_threshold, expert_capacity=expert_capacity)
    assert jnp.array_equal(expert_indices, ref_ei)
    assert jnp.allclose(expert_probs, ref_ep, rtol=1e-6, atol=1e-6)

    print("KERNEL_OK")
</pallas_src>

<mosaic_0001>
module attributes {stable_mosaic.version = 11 : i64} {
  func.func @_router_kernel(%arg0: i32, %arg1: memref<16x32xf32, #tpu.memory_space<vmem>>, %arg2: memref<8x32xf32, #tpu.memory_space<vmem>>, %arg3: memref<1x8xf32, #tpu.memory_space<vmem>>, %arg4: memref<16x8xf32, #tpu.memory_space<vmem>>, %arg5: memref<16x8xf32, #tpu.memory_space<vmem>>, %arg6: memref<16x8xi32, #tpu.memory_space<vmem>>) attributes {dimension_semantics = [#tpu.dimension_semantics<parallel>], iteration_bounds = array<i64: 1>, scalar_prefetch = 0 : i64, scratch_operands = 0 : i64, tpu.core_type = #tpu.core_type<tc>, window_params = [{transform_indices = @transform_0, window_bounds = array<i64: 16, 32>}, {pipeline_mode = #tpu.pipeline_mode<synchronous>, transform_indices = @transform_1, window_bounds = array<i64: 8, 32>}, {pipeline_mode = #tpu.pipeline_mode<synchronous>, transform_indices = @transform_2, window_bounds = array<i64: 1, 8>}, {transform_indices = @transform_3, window_bounds = array<i64: 16, 8>}, {transform_indices = @transform_4, window_bounds = array<i64: 16, 8>}, {transform_indices = @transform_5, window_bounds = array<i64: 16, 8>}]} {
    %c0 = arith.constant 0 : index
    %c0_0 = arith.constant 0 : index
    %0 = vector.load %arg1[%c0, %c0_0] : memref<16x32xf32, #tpu.memory_space<vmem>>, vector<16x32xf32>
    %c0_1 = arith.constant 0 : index
    %c0_2 = arith.constant 0 : index
    %1 = vector.load %arg2[%c0_1, %c0_2] : memref<8x32xf32, #tpu.memory_space<vmem>>, vector<8x32xf32>
    %cst = arith.constant dense<0.000000e+00> : vector<16x8xf32>
    %2 = tpu.matmul %0, %1, %cst {dimension_numbers = #tpu.dot_dimension_numbers<[1], [1], [0], [0], [0, 0, 1, 0], [], []>} : vector<16x32xf32>, vector<8x32xf32>, vector<16x8xf32> -> vector<16x8xf32>
    %c0_3 = arith.constant 0 : index
    %c0_4 = arith.constant 0 : index
    %3 = vector.load %arg3[%c0_3, %c0_4] : memref<1x8xf32, #tpu.memory_space<vmem>>, vector<1x8xf32>
    %4 = vector.broadcast %3 : vector<1x8xf32> to vector<16x8xf32>
    %5 = arith.addf %2, %4 : vector<16x8xf32>
    %c0_5 = arith.constant 0 : index
    %c0_6 = arith.constant 0 : index
    %6 = vector.load %arg4[%c0_5, %c0_6] : memref<16x8xf32, #tpu.memory_space<vmem>>, vector<16x8xf32>
    tpu.vector_store %arg4[%c0_5, %c0_6], %5 {strides = array<i32>} : memref<16x8xf32, #tpu.memory_space<vmem>>, vector<16x8xf32>,
    %cst_7 = arith.constant dense<0xFF800000> : vector<16xf32>
    %7 = vector.multi_reduction <maximumf>, %5, %cst_7 [1] : vector<16x8xf32> to vector<16xf32>
    %8 = vector.shape_cast %7 : vector<16xf32> to vector<16x1xf32>
    %9 = vector.broadcast %8 : vector<16x1xf32> to vector<16x8xf32>
    %10 = arith.subf %5, %9 : vector<16x8xf32>
    %11 = math.exp %10 : vector<16x8xf32>
    %cst_8 = arith.constant dense<0.000000e+00> : vector<16xf32>
    %12 = vector.multi_reduction <add>, %11, %cst_8 [1] : vector<16x8xf32> to vector<16xf32>
    %13 = vector.shape_cast %12 : vector<16xf32> to vector<16x1xf32>
    %14 = tpu.reciprocal %13 {approx = true} : vector<16x1xf32> -> vector<16x1xf32>
    %15 = vector.broadcast %14 : vector<16x1xf32> to vector<16x8xf32>
    %16 = arith.mulf %11, %15 : vector<16x8xf32>
    %c0_9 = arith.constant 0 : index
    %c0_10 = arith.constant 0 : index
    %17 = vector.load %arg5[%c0_9, %c0_10] : memref<16x8xf32, #tpu.memory_space<vmem>>, vector<16x8xf32>
    tpu.vector_store %arg5[%c0_9, %c0_10], %16 {strides = array<i32>} : memref<16x8xf32, #tpu.memory_space<vmem>>, vector<16x8xf32>,
    %18 = tpu.iota {dimensions = array<i32: 1>} : vector<16x8xi32>
    %cst_11 = arith.constant 0.000000e+00 : f32
    %19 = vector.broadcast %cst_11 : f32 to vector<16x1xf32>
    %false = arith.constant false
    %20 = vector.broadcast %false : i1 to vector<16x8xi1>
    %cst_12 = arith.constant dense<0xFF800000> : vector<16xf32>
    %21 = vector.multi_reduction <maximumf>, %16, %cst_12 [1] : vector<16x8xf32> to vector<16xf32>
    %22 = vector.shape_cast %21 : vector<16xf32> to vector<16x1xf32>
    %23 = vector.broadcast %22 : vector<16x1xf32> to vector<16x8xf32>
    %24 = arith.cmpf oeq, %16, %23 : vector<16x8xf32>
    %c8_i32 = arith.constant 8 : i32
    %25 = vector.broadcast %c8_i32 : i32 to vector<16x8xi32>
    %26 = arith.select %24, %18, %25 : vector<16x8xi1>, vector<16x8xi32>
    %cst_13 = arith.constant dense<2147483647> : vector<16xi32>
    %27 = vector.multi_reduction <minsi>, %26, %cst_13 [1] : vector<16x8xi32> to vector<16xi32>
    %28 = vector.shape_cast %27 : vector<16xi32> to vector<16x1xi32>
    %29 = vector.broadcast %28 : vector<16x1xi32> to vector<16x8xi32>
    %30 = arith.cmpi eq, %18, %29 : vector<16x8xi32>
    %31 = arith.addf %19, %22 : vector<16x1xf32>
    %true = arith.constant true
    %32 = vector.broadcast %true : i1 to vector<16x1xi1>
    %33 = vector.broadcast %32 : vector<16x1xi1> to vector<16x8xi1>
    %34 = arith.andi %30, %33 : vector<16x8xi1>
    %35 = arith.ori %20, %34 : vector<16x8xi1>
    %cst_14 = arith.constant -1.000000e+00 : f32
    %36 = vector.broadcast %cst_14 : f32 to vector<16x8xf32>
    %37 = arith.select %30, %36, %16 : vector<16x8xi1>, vector<16x8xf32>
    %cst_15 = arith.constant dense<0xFF800000> : vector<16xf32>
    %38 = vector.multi_reduction <maximumf>, %37, %cst_15 [1] : vector<16x8xf32> to vector<16xf32>
    %39 = vector.shape_cast %38 : vector<16xf32> to vector<16x1xf32>
    %40 = vector.broadcast %39 : vector<16x1xf32> to vector<16x8xf32>
    %41 = arith.cmpf oeq, %37, %40 : vector<16x8xf32>
    %c8_i32_16 = arith.constant 8 : i32
    %42 = vector.broadcast %c8_i32_16 : i32 to vector<16x8xi32>
    %43 = arith.select %41, %18, %42 : vector<16x8xi1>, vector<16x8xi32>
    %cst_17 = arith.constant dense<2147483647> : vector<16xi32>
    %44 = vector.multi_reduction <minsi>, %43, %cst_17 [1] : vector<16x8xi32> to vector<16xi32>
    %45 = vector.shape_cast %44 : vector<16xi32> to vector<16x1xi32>
    %46 = vector.broadcast %45 : vector<16x1xi32> to vector<16x8xi32>
    %47 = arith.cmpi eq, %18, %46 : vector<16x8xi32>
    %48 = arith.addf %31, %39 : vector<16x1xf32>
    %cst_18 = arith.constant 5.000000e-01 : f32
    %49 = vector.broadcast %cst_18 : f32 to vector<16x1xf32>
    %50 = arith.cmpf ole, %48, %49 : vector<16x1xf32>
    %51 = vector.broadcast %50 : vector<16x1xi1> to vector<16x8xi1>
    %52 = arith.andi %47, %51 : vector<16x8xi1>
    %53 = arith.ori %35, %52 : vector<16x8xi1>
    %cst_19 = arith.constant -1.000000e+00 : f32
    %54 = vector.broadcast %cst_19 : f32 to vector<16x8xf32>
    %55 = arith.select %47, %54, %37 : vector<16x8xi1>, vector<16x8xf32>
    %cst_20 = arith.constant dense<0xFF800000> : vector<16xf32>
    %56 = vector.multi_reduction <maximumf>, %55, %cst_20 [1] : vector<16x8xf32> to vector<16xf32>
    %57 = vector.shape_cast %56 : vector<16xf32> to vector<16x1xf32>
    %58 = vector.broadcast %57 : vector<16x1xf32> to vector<16x8xf32>
    %59 = arith.cmpf oeq, %55, %58 : vector<16x8xf32>
    %c8_i32_21 = arith.constant 8 : i32
    %60 = vector.broadcast %c8_i32_21 : i32 to vector<16x8xi32>
    %61 = arith.select %59, %18, %60 : vector<16x8xi1>, vector<16x8xi32>
    %cst_22 = arith.constant dense<2147483647> : vector<16xi32>
    %62 = vector.multi_reduction <minsi>, %61, %cst_22 [1] : vector<16x8xi32> to vector<16xi32>
    %63 = vector.shape_cast %62 : vector<16xi32> to vector<16x1xi32>
    %64 = vector.broadcast %63 : vector<16x1xi32> to vector<16x8xi32>
    %65 = arith.cmpi eq, %18, %64 : vector<16x8xi32>
    %66 = arith.addf %48, %57 : vector<16x1xf32>
    %cst_23 = arith.constant 5.000000e-01 : f32
    %67 = vector.broadcast %cst_23 : f32 to vector<16x1xf32>
    %68 = arith.cmpf ole, %66, %67 : vector<16x1xf32>
    %69 = vector.broadcast %68 : vector<16x1xi1> to vector<16x8xi1>
    %70 = arith.andi %65, %69 : vector<16x8xi1>
    %71 = arith.ori %53, %70 : vector<16x8xi1>
    %cst_24 = arith.constant -1.000000e+00 : f32
    %72 = vector.broadcast %cst_24 : f32 to vector<16x8xf32>
    %73 = arith.select %65, %72, %55 : vector<16x8xi1>, vector<16x8xf32>
    %cst_25 = arith.constant dense<0xFF800000> : vector<16xf32>
    %74 = vector.multi_reduction <maximumf>, %73, %cst_25 [1] : vector<16x8xf32> to vector<16xf32>
    %75 = vector.shape_cast %74 : vector<16xf32> to vector<16x1xf32>
    %76 = vector.broadcast %75 : vector<16x1xf32> to vector<16x8xf32>
    %77 = arith.cmpf oeq, %73, %76 : vector<16x8xf32>
    %c8_i32_26 = arith.constant 8 : i32
    %78 = vector.broadcast %c8_i32_26 : i32 to vector<16x8xi32>
    %79 = arith.select %77, %18, %78 : vector<16x8xi1>, vector<16x8xi32>
    %cst_27 = arith.constant dense<2147483647> : vector<16xi32>
    %80 = vector.multi_reduction <minsi>, %79, %cst_27 [1] : vector<16x8xi32> to vector<16xi32>
    %81 = vector.shape_cast %80 : vector<16xi32> to vector<16x1xi32>
    %82 = vector.broadcast %81 : vector<16x1xi32> to vector<16x8xi32>
    %83 = arith.cmpi eq, %18, %82 : vector<16x8xi32>
    %84 = arith.addf %66, %75 : vector<16x1xf32>
    %cst_28 = arith.constant 5.000000e-01 : f32
    %85 = vector.broadcast %cst_28 : f32 to vector<16x1xf32>
    %86 = arith.cmpf ole, %84, %85 : vector<16x1xf32>
    %87 = vector.broadcast %86 : vector<16x1xi1> to vector<16x8xi1>
    %88 = arith.andi %83, %87 : vector<16x8xi1>
    %89 = arith.ori %71, %88 : vector<16x8xi1>
    %cst_29 = arith.constant -1.000000e+00 : f32
    %90 = vector.broadcast %cst_29 : f32 to vector<16x8xf32>
    %91 = arith.select %83, %90, %73 : vector<16x8xi1>, vector<16x8xf32>
    %cst_30 = arith.constant dense<0xFF800000> : vector<16xf32>
    %92 = vector.multi_reduction <maximumf>, %91, %cst_30 [1] : vector<16x8xf32> to vector<16xf32>
    %93 = vector.shape_cast %92 : vector<16xf32> to vector<16x1xf32>
    %94 = vector.broadcast %93 : vector<16x1xf32> to vector<16x8xf32>
    %95 = arith.cmpf oeq, %91, %94 : vector<16x8xf32>
    %c8_i32_31 = arith.constant 8 : i32
    %96 = vector.broadcast %c8_i32_31 : i32 to vector<16x8xi32>
    %97 = arith.select %95, %18, %96 : vector<16x8xi1>, vector<16x8xi32>
    %cst_32 = arith.constant dense<2147483647> : vector<16xi32>
    %98 = vector.multi_reduction <minsi>, %97, %cst_32 [1] : vector<16x8xi32> to vector<16xi32>
    %99 = vector.shape_cast %98 : vector<16xi32> to vector<16x1xi32>
    %100 = vector.broadcast %99 : vector<16x1xi32> to vector<16x8xi32>
    %101 = arith.cmpi eq, %18, %100 : vector<16x8xi32>
    %102 = arith.addf %84, %93 : vector<16x1xf32>
    %cst_33 = arith.constant 5.000000e-01 : f32
    %103 = vector.broadcast %cst_33 : f32 to vector<16x1xf32>
    %104 = arith.cmpf ole, %102, %103 : vector<16x1xf32>
    %105 = vector.broadcast %104 : vector<16x1xi1> to vector<16x8xi1>
    %106 = arith.andi %101, %105 : vector<16x8xi1>
    %107 = arith.ori %89, %106 : vector<16x8xi1>
    %cst_34 = arith.constant -1.000000e+00 : f32
    %108 = vector.broadcast %cst_34 : f32 to vector<16x8xf32>
    %109 = arith.select %101, %108, %91 : vector<16x8xi1>, vector<16x8xf32>
    %cst_35 = arith.constant dense<0xFF800000> : vector<16xf32>
    %110 = vector.multi_reduction <maximumf>, %109, %cst_35 [1] : vector<16x8xf32> to vector<16xf32>
    %111 = vector.shape_cast %110 : vector<16xf32> to vector<16x1xf32>
    %112 = vector.broadcast %111 : vector<16x1xf32> to vector<16x8xf32>
    %113 = arith.cmpf oeq, %109, %112 : vector<16x8xf32>
    %c8_i32_36 = arith.constant 8 : i32
    %114 = vector.broadcast %c8_i32_36 : i32 to vector<16x8xi32>
    %115 = arith.select %113, %18, %114 : vector<16x8xi1>, vector<16x8xi32>
    %cst_37 = arith.constant dense<2147483647> : vector<16xi32>
    %116 = vector.multi_reduction <minsi>, %115, %cst_37 [1] : vector<16x8xi32> to vector<16xi32>
    %117 = vector.shape_cast %116 : vector<16xi32> to vector<16x1xi32>
    %118 = vector.broadcast %117 : vector<16x1xi32> to vector<16x8xi32>
    %119 = arith.cmpi eq, %18, %118 : vector<16x8xi32>
    %120 = arith.addf %102, %111 : vector<16x1xf32>
    %cst_38 = arith.constant 5.000000e-01 : f32
    %121 = vector.broadcast %cst_38 : f32 to vector<16x1xf32>
    %122 = arith.cmpf ole, %120, %121 : vector<16x1xf32>
    %123 = vector.broadcast %122 : vector<16x1xi1> to vector<16x8xi1>
    %124 = arith.andi %119, %123 : vector<16x8xi1>
    %125 = arith.ori %107, %124 : vector<16x8xi1>
    %cst_39 = arith.constant -1.000000e+00 : f32
    %126 = vector.broadcast %cst_39 : f32 to vector<16x8xf32>
    %127 = arith.select %119, %126, %109 : vector<16x8xi1>, vector<16x8xf32>
    %cst_40 = arith.constant dense<0xFF800000> : vector<16xf32>
    %128 = vector.multi_reduction <maximumf>, %127, %cst_40 [1] : vector<16x8xf32> to vector<16xf32>
    %129 = vector.shape_cast %128 : vector<16xf32> to vector<16x1xf32>
    %130 = vector.broadcast %129 : vector<16x1xf32> to vector<16x8xf32>
    %131 = arith.cmpf oeq, %127, %130 : vector<16x8xf32>
    %c8_i32_41 = arith.constant 8 : i32
    %132 = vector.broadcast %c8_i32_41 : i32 to vector<16x8xi32>
    %133 = arith.select %131, %18, %132 : vector<16x8xi1>, vector<16x8xi32>
    %cst_42 = arith.constant dense<2147483647> : vector<16xi32>
    %134 = vector.multi_reduction <minsi>, %133, %cst_42 [1] : vector<16x8xi32> to vector<16xi32>
    %135 = vector.shape_cast %134 : vector<16xi32> to vector<16x1xi32>
    %136 = vector.broadcast %135 : vector<16x1xi32> to vector<16x8xi32>
    %137 = arith.cmpi eq, %18, %136 : vector<16x8xi32>
    %138 = arith.addf %120, %129 : vector<16x1xf32>
    %cst_43 = arith.constant 5.000000e-01 : f32
    %139 = vector.broadcast %cst_43 : f32 to vector<16x1xf32>
    %140 = arith.cmpf ole, %138, %139 : vector<16x1xf32>
    %141 = vector.broadcast %140 : vector<16x1xi1> to vector<16x8xi1>
    %142 = arith.andi %137, %141 : vector<16x8xi1>
    %143 = arith.ori %125, %142 : vector<16x8xi1>
    %cst_44 = arith.constant -1.000000e+00 : f32
    %144 = vector.broadcast %cst_44 : f32 to vector<16x8xf32>
    %145 = arith.select %137, %144, %127 : vector<16x8xi1>, vector<16x8xf32>
    %cst_45 = arith.constant dense<0xFF800000> : vector<16xf32>
    %146 = vector.multi_reduction <maximumf>, %145, %cst_45 [1] : vector<16x8xf32> to vector<16xf32>
    %147 = vector.shape_cast %146 : vector<16xf32> to vector<16x1xf32>
    %148 = vector.broadcast %147 : vector<16x1xf32> to vector<16x8xf32>
    %149 = arith.cmpf oeq, %145, %148 : vector<16x8xf32>
    %c8_i32_46 = arith.constant 8 : i32
    %150 = vector.broadcast %c8_i32_46 : i32 to vector<16x8xi32>
    %151 = arith.select %149, %18, %150 : vector<16x8xi1>, vector<16x8xi32>
    %cst_47 = arith.constant dense<2147483647> : vector<16xi32>
    %152 = vector.multi_reduction <minsi>, %151, %cst_47 [1] : vector<16x8xi32> to vector<16xi32>
    %153 = vector.shape_cast %152 : vector<16xi32> to vector<16x1xi32>
    %154 = vector.broadcast %153 : vector<16x1xi32> to vector<16x8xi32>
    %155 = arith.cmpi eq, %18, %154 : vector<16x8xi32>
    %156 = arith.addf %138, %147 : vector<16x1xf32>
    %cst_48 = arith.constant 5.000000e-01 : f32
    %157 = vector.broadcast %cst_48 : f32 to vector<16x1xf32>
    %158 = arith.cmpf ole, %156, %157 : vector<16x1xf32>
    %159 = vector.broadcast %158 : vector<16x1xi1> to vector<16x8xi1>
    %160 = arith.andi %155, %159 : vector<16x8xi1>
    %161 = arith.ori %143, %160 : vector<16x8xi1>
    %162 = arith.extui %161 : vector<16x8xi1> to vector<16x8xi32>
    %c0_49 = arith.constant 0 : index
    %c0_50 = arith.constant 0 : index
    %163 = vector.load %arg6[%c0_49, %c0_50] : memref<16x8xi32, #tpu.memory_space<vmem>>, vector<16x8xi32>
    tpu.vector_store %arg6[%c0_49, %c0_50], %162 {strides = array<i32>} : memref<16x8xi32, #tpu.memory_space<vmem>>, vector<16x8xi32>,
    return
  }
  func.func @transform_0(%arg0: i32) -> (i32, i32) {
    %c0_i32 = arith.constant 0 : i32
    %c0_i32_0 = arith.constant 0 : i32
    return %arg0, %c0_i32 : i32, i32
  }
  func.func @transform_1(%arg0: i32) -> (i32, i32) {
    %c0_i32 = arith.constant 0 : i32
    %c0_i32_0 = arith.constant 0 : i32
    %c0_i32_1 = arith.constant 0 : i32
    return %c0_i32, %c0_i32_0 : i32, i32
  }
  func.func @transform_2(%arg0: i32) -> (i32, i32) {
    %c0_i32 = arith.constant 0 : i32
    %c0_i32_0 = arith.constant 0 : i32
    %c0_i32_1 = arith.constant 0 : i32
    return %c0_i32, %c0_i32_0 : i32, i32
  }
  func.func @transform_3(%arg0: i32) -> (i32, i32) {
    %c0_i32 = arith.constant 0 : i32
    %c0_i32_0 = arith.constant 0 : i32
    return %arg0, %c0_i32 : i32, i32
  }
  func.func @transform_4(%arg0: i32) -> (i32, i32) {
    %c0_i32 = arith.constant 0 : i32
    %c0_i32_0 = arith.constant 0 : i32
    return %arg0, %c0_i32 : i32, i32
  }
  func.func @transform_5(%arg0: i32) -> (i32, i32) {
    %c0_i32 = arith.constant 0 : i32
    %c0_i32_0 = arith.constant 0 : i32
    return %arg0, %c0_i32 : i32, i32
  }
}

</mosaic_0001>

<llo_original>
// kernel: tpu_custom_call.1
$region0: #{tpu_custom_call.1}
  #allocation0 [shape = 'u32[]', space=smem, size = 0x4, offset = 0x4, fixed_abs, tag = 'smem constant byte address 0x4 - core index']
  #allocation1 [shape = 'u32[144,128]{1,0:T(1,128)}', space=vmem, size = 0x12000, scoped, tag = 'internal scratch']
  %s0 = inlined_call_operand.hbm [shape: f32[16,32], index: 0, kind: input, shape index: {}]
  %s1 = inlined_call_operand.hbm [shape: f32[8,32], index: 1, kind: input, shape index: {}]
  %s2 = inlined_call_operand.vmem [shape: f32[1,8], index: 2, kind: input, shape index: {}]
  %s3 = inlined_call_operand.vmem [shape: f32[16,8], index: 3, kind: output, shape index: {0}]
  %s4 = inlined_call_operand.vmem [shape: f32[16,8], index: 4, kind: output, shape index: {1}]
  %s5 = inlined_call_operand.vmem [shape: s32[16,8], index: 5, kind: output, shape index: {2}]
  %6 = xla_tuple %s3, %s4, %s5
  %s7 = sld [smem:[#allocation0]]
  $region46: #{tpu_custom_call.1} parent=0
    _
  %s9 = ssub.s32 1, %s7
  %s10 = scalar_select 0, %s9, %s7
  $region1: #{tpu_custom_call.1} parent=0
    #allocation2 [shape = 'u8[8192]{0}', space=vmem, size = 0x2000, scoped, tag = 'input window, operand 0, single buffered']
    #allocation3 [shape = 's32[1]{0}', space=sflag, size = 0x4, scoped, tag = 'scoped memory for tpu_custom_call.1']
    #allocation4 [shape = 'u8[4096]{0}', space=vmem, size = 0x1000, scoped, tag = 'input window, operand 1, single buffered']
    #allocation5 [shape = 's32[1]{0}', space=sflag, size = 0x4, scoped, tag = 'scoped memory for tpu_custom_call.1']
    %11 = vsyncpa [#allocation3], 0
    %12 = vsyncpa [#allocation5], 0
    // Predicated region
    $region2: #{tpu_custom_call.1} parent=1 // pred_check
      _
    $region3: #{tpu_custom_call.1} parent=1 // pred_check_branch
      %14 = sbr.rel (0) target = $region5
    $region4: #{tpu_custom_call.1} parent=1 // pred_region
      %s16 = ssub.s32 256, 256
      %17 = vsyncadd [#allocation3], %s16
      %s18 = sshll.u32 [#allocation2], 4
      %s19 = int_to_ptr.vmem [resolvable:$true] %s18
      %24 = dma.hbm_to_vmem [thread:$0]  %s0, 256, %s19, [#allocation3], 128, 128, 8
    $region5: #{tpu_custom_call.1} parent=1 // pred_fallthru
      _
    // Predicated region
    $region6: #{tpu_custom_call.1} parent=1 // pred_check
      _
    $region7: #{tpu_custom_call.1} parent=1 // pred_check_branch
      %26 = sbr.rel (0) target = $region9
    $region8: #{tpu_custom_call.1} parent=1 // pred_region
      %s28 = ssub.s32 128, 128
      %29 = vsyncadd [#allocation5], %s28
      %s31 = sshll.u32 [#allocation4], 4
      %s32 = int_to_ptr.vmem [resolvable:$true] %s31
      %34 = dma.hbm_to_vmem [thread:$0]  %s1, 128, %s32, [#allocation5]
    $region9: #{tpu_custom_call.1} parent=1 // pred_fallthru
      _
    // Predicated region
    $region10: #{tpu_custom_call.1} parent=1 // pred_check
      _
    $region11: #{tpu_custom_call.1} parent=1 // pred_check_branch
      %36 = sbr.rel (0) target = $region13
    $region12: #{tpu_custom_call.1} parent=1 // pred_region
      _
    $region13: #{tpu_custom_call.1} parent=1 // pred_fallthru
      _
    // Predicated region
    $region14: #{tpu_custom_call.1} parent=1 // pred_check
      _
    $region15: #{tpu_custom_call.1} parent=1 // pred_check_branch
      %38 = sbr.rel (0) target = $region17
    $region16: #{tpu_custom_call.1} parent=1 // pred_region
      %39 = dma.done [#allocation3], 256
    $region17: #{tpu_custom_call.1} parent=1 // pred_fallthru
      _
    // Predicated region
    $region18: #{tpu_custom_call.1} parent=1 // pred_check
      _
    $region19: #{tpu_custom_call.1} parent=1 // pred_check_branch
      %41 = sbr.rel (0) target = $region21
    $region20: #{tpu_custom_call.1} parent=1 // pred_region
      %42 = dma.done [#allocation5], 128
    $region21: #{tpu_custom_call.1} parent=1 // pred_fallthru
      _
    %v43 = vld [vmem:[#allocation2] sm:$0xff]
    %v44 = vld [vmem:[#allocation2 + $0x8] sm:$0xff]
    %v45 = vld [vmem:[#allocation4] sm:$0xff]
    %v46 = vld [vmem:[%s2] sm:$0x1]
    %v48 = vlaneseq
    %v49 = vshrl.u32 %v48, 7
    %v50 = vsub.s32 0, %v49
    %v51 = vrot.slane %v46, %v50
    %vm53 = vcmask 261120
    %v55 = vsel %vm53, %v43, 0
    %v58 = vsel %vm53, %v44, 0
    %v61 = vsel %vm53, %v45, 0
    %63 = vmatprep.subr.mxu0 0.0
    %64 = vmatpush1.xpose.msra.mxu0 %v61
    %65 = vmatprep.subr.mxu0 0.0
    %66 = vmatpush1.xpose.msra.mxu0 0.0
    %67 = vmatprep.subr.mxu0 0.0
    %68 = vmatpush1.xpose.msra.mxu0 0.0
    %69 = vmatprep.subr.mxu0 0.0
    %70 = vmatpush1.xpose.msra.mxu0 0.0
    %71 = vmatprep.subr.mxu0 0.0
    %72 = vmatpush1.xpose.msra.mxu0 0.0
    %73 = vmatprep.subr.mxu0 0.0
    %74 = vmatpush1.xpose.msra.mxu0 0.0
    %75 = vmatprep.subr.mxu0 0.0
    %76 = vmatpush1.xpose.msra.mxu0 0.0
    %77 = vmatprep.subr.mxu0 0.0
    %78 = vmatpush1.xpose.msra.mxu0 0.0
    %79 = vmatprep.subr.mxu0 0.0
    %80 = vmatpush1.xpose.msra.mxu0 0.0
    %81 = vmatprep.subr.mxu0 0.0
    %82 = vmatpush1.xpose.msra.mxu0 0.0
    %83 = vmatprep.subr.mxu0 0.0
    %84 = vmatpush1.xpose.msra.mxu0 0.0
    %85 = vmatprep.subr.mxu0 0.0
    %86 = vmatpush1.xpose.msra.mxu0 0.0
    %87 = vmatprep.subr.mxu0 0.0
    %88 = vmatpush1.xpose.msra.mxu0 0.0
    %89 = vmatprep.subr.mxu0 0.0
    %90 = vmatpush1.xpose.msra.mxu0 0.0
    %91 = vmatprep.subr.mxu0 0.0
    %92 = vmatpush1.xpose.msra.mxu0 0.0
    %93 = vmatprep.subr.mxu0 0.0
    %94 = vmatpush1.xpose.msra.mxu0 0.0
    %95 = vmatprep.subr.mxu0 0.0
    %96 = vmatpush1.xpose.msra.mxu0 0.0
    %97 = vmatprep.subr.mxu0 0.0
    %98 = vmatpush1.xpose.msra.mxu0 0.0
    %99 = vmatprep.subr.mxu0 0.0
    %100 = vmatpush1.xpose.msra.mxu0 0.0
    %101 = vmatprep.subr.mxu0 0.0
    %102 = vmatpush1.xpose.msra.mxu0 0.0
    %103 = vmatprep.subr.mxu0 0.0
    %104 = vmatpush1.xpose.msra.mxu0 0.0
    %105 = vmatprep.subr.mxu0 0.0
    %106 = vmatpush1.xpose.msra.mxu0 0.0
    %107 = vmatprep.subr.mxu0 0.0
    %108 = vmatpush1.xpose.msra.mxu0 0.0
    %109 = vmatprep.subr.mxu0 0.0
    %110 = vmatpush1.xpose.msra.mxu0 0.0
    %111 = vmatprep.subr.mxu0 0.0
    %112 = vmatpush1.xpose.msra.mxu0 0.0
    %113 = vmatprep.subr.mxu0 0.0
    %114 = vmatpush1.xpose.msra.mxu0 0.0
    %115 = vmatprep.subr.mxu0 0.0
    %116 = vmatpush1.xpose.msra.mxu0 0.0
    %117 = vmatprep.subr.mxu0 0.0
    %118 = vmatpush1.xpose.msra.mxu0 0.0
    %119 = vmatprep.subr.mxu0 0.0
    %120 = vmatpush1.xpose.msra.mxu0 0.0
    %121 = vmatprep.subr.mxu0 0.0
    %122 = vmatpush1.xpose.msra.mxu0 0.0
    %123 = vmatprep.subr.mxu0 0.0
    %124 = vmatpush1.xpose.msra.mxu0 0.0
    %125 = vmatprep.subr.mxu0 0.0
    %126 = vmatpush1.xpose.msra.mxu0 0.0
    %127 = vmatprep.mubr.f32.mxu0 0.0
    %128 = vmatmul.mubr.f32.gmra.mrb[0].mxu0 %v55
    %v129 = vpop.f32.mrb[0].mxu0
    %v130 = vadd.f32 %v51, %v129
    %v131 = vpop.f32.mrb[0].mxu0
    %132 = vmatprep.mubr.f32.mxu0 0.0
    %133 = vmatmul.mubr.f32.gmra.mrb[0].mxu0 %v58
    %v134 = vpop.f32.mrb[0].mxu0
    %v135 = vadd.f32 %v51, %v134
    %v136 = vpop.f32.mrb[0].mxu0
    %137 = vdwg.mxu0
    %vm138 = vcmask 64512
    %139 = vst.msk [vmem:[%s3] sm:$0xff] %vm138, %v130
    %140 = vst.msk [vmem:[%s3 + $0x8] sm:$0xff] %vm138, %v135
    %v141 = vsel %vm138, %v130, -inf
    %142 = vmax.xlane.f32.xlu0 %v141
    %v143 = vpop.xlane.xlu0 %142
    %v144 = vsel %vm138, %v135, -inf
    %145 = vmax.xlane.f32.xlu0 %v144
    %v146 = vpop.xlane.xlu0 %145
    %v147 = vsub.f32 %v130, %v143
    %v148 = vsub.f32 %v135, %v146
    %v149 = vmul.f32 %v147, 1.442695
    %v150 = vpow.pop %v149
    %v151 = vmul.f32 %v148, 1.442695
    %v152 = vpow.pop %v151
    %v153 = vsel %vm138, %v150, 0.0
    %154 = vadd.xlane.f32.xlu0 %v153
    %v155 = vpop.xlane.xlu0 %154
    %v156 = vsel %vm138, %v152, 0.0
    %157 = vadd.xlane.f32.xlu0 %v156
    %v158 = vpop.xlane.xlu0 %157
    %v159 = vrcp.pop %v155
    %v160 = vrcp.pop %v158
    %v161 = vmul.f32 %v150, %v159
    %v162 = vmul.f32 %v152, %v160
    %163 = vst.msk [vmem:[%s4] sm:$0xff] %vm138, %v161
    %164 = vst.msk [vmem:[%s4 + $0x8] sm:$0xff] %vm138, %v162
    %v165 = vlaneseq
    %v166 = vand.u32 %v165, 127
    %v167 = vsel %vm138, %v161, -inf
    %168 = vmax.xlane.f32.xlu0 %v167
    %v169 = vpop.xlane.xlu0 %168
    %v170 = vsel %vm138, %v162, -inf
    %171 = vmax.xlane.f32.xlu0 %v170
    %v172 = vpop.xlane.xlu0 %171
    %vm173 = vcmp.eq.f32.partialorder %v161, %v169
    %vm174 = vcmp.eq.f32.partialorder %v162, %v172
    %v175 = vsel %vm173, %v166, 8
    %v176 = vsel %vm174, %v166, 8
    %v177 = vsel %vm138, %v175, 2147483647
    %v178 = vand.u32 %v177, 65535
    %v179 = vshra.s32 %v177, 16
    %v180 = vcvt.s32.f32 %v178
    %v181 = vcvt.s32.f32 %v179
    %182 = vmin.xlane.f32.xlu0 %v181
    %v183 = vpop.xlane.xlu0 %182
    %vm184 = vcmp.eq.f32.partialorder %v181, %v183
    %v185 = vsel %vm184, %v180, inf
    %186 = vmin.xlane.f32.xlu0 %v185
    %v187 = vpop.xlane.xlu0 %186
    %v188 = vcvt.f32.s32 %v187
    %v189 = vcvt.f32.s32 %v183
    %v190 = vshll.u32 %v189, 16
    %v191 = vadd.s32 %v190, %v188
    %v192 = vsel %vm138, %v176, 2147483647
    %v193 = vand.u32 %v192, 65535
    %v194 = vshra.s32 %v192, 16
    %v195 = vcvt.s32.f32 %v193
    %v196 = vcvt.s32.f32 %v194
    %197 = vmin.xlane.f32.xlu0 %v196
    %v198 = vpop.xlane.xlu0 %197
    %vm199 = vcmp.eq.f32.partialorder %v196, %v198
    %v200 = vsel %vm199, %v195, inf
    %201 = vmin.xlane.f32.xlu0 %v200
    %v202 = vpop.xlane.xlu0 %201
    %v203 = vcvt.f32.s32 %v202
    %v204 = vcvt.f32.s32 %v198
    %v205 = vshll.u32 %v204, 16
    %v206 = vadd.s32 %v205, %v203
    %vm207 = vcmp.eq.s32.totalorder %v166, %v191
    %vm208 = vcmp.eq.s32.totalorder %v166, %v206
    %v209 = vadd.f32 %v169, 0.0
    %v210 = vadd.f32 %v172, 0.0
    %v211 = vsel %vm207, -1.0, %v161
    %v212 = vsel %vm208, -1.0, %v162
    %v213 = vsel %vm138, %v211, -inf
    %214 = vmax.xlane.f32.xlu0 %v213
    %v215 = vpop.xlane.xlu0 %214
    %v216 = vsel %vm138, %v212, -inf
    %217 = vmax.xlane.f32.xlu0 %v216
    %v218 = vpop.xlane.xlu0 %217
    %vm219 = vcmp.eq.f32.partialorder %v211, %v215
    %vm220 = vcmp.eq.f32.partialorder %v212, %v218
    %v221 = vsel %vm219, %v166, 8
    %v222 = vsel %vm220, %v166, 8
    %v223 = vsel %vm138, %v221, 2147483647
    %v224 = vand.u32 %v223, 65535
    %v225 = vshra.s32 %v223, 16
    %v226 = vcvt.s32.f32 %v224
    %v227 = vcvt.s32.f32 %v225
    %228 = vmin.xlane.f32.xlu0 %v227
    %v229 = vpop.xlane.xlu0 %228
    %vm230 = vcmp.eq.f32.partialorder %v227, %v229
    %v231 = vsel %vm230, %v226, inf
    %232 = vmin.xlane.f32.xlu0 %v231
    %v233 = vpop.xlane.xlu0 %232
    %v234 = vcvt.f32.s32 %v233
    %v235 = vcvt.f32.s32 %v229
    %v236 = vshll.u32 %v235, 16
    %v237 = vadd.s32 %v236, %v234
    %v238 = vsel %vm138, %v222, 2147483647
    %v239 = vand.u32 %v238, 65535
    %v240 = vshra.s32 %v238, 16
    %v241 = vcvt.s32.f32 %v239
    %v242 = vcvt.s32.f32 %v240
    %243 = vmin.xlane.f32.xlu0 %v242
    %v244 = vpop.xlane.xlu0 %243
    %vm245 = vcmp.eq.f32.partialorder %v242, %v244
    %v246 = vsel %vm245, %v241, inf
    %247 = vmin.xlane.f32.xlu0 %v246
    %v248 = vpop.xlane.xlu0 %247
    %v249 = vcvt.f32.s32 %v248
    %v250 = vcvt.f32.s32 %v244
    %v251 = vshll.u32 %v250, 16
    %v252 = vadd.s32 %v251, %v249
    %vm253 = vcmp.eq.s32.totalorder %v166, %v237
    %vm254 = vcmp.eq.s32.totalorder %v166, %v252
    %v255 = vadd.f32 %v209, %v215
    %v256 = vadd.f32 %v210, %v218
    %vm257 = vcmp.le.f32.partialorder %v255, 0.5
    %vm258 = vcmp.le.f32.partialorder %v256, 0.5
    %v259 = vsel %vm257, 1, 0
    %v260 = vsel %vm258, 1, 0
    %vm261 = vcmp.eq.s32.totalorder %v259, 1
    %vm262 = vcmp.eq.s32.totalorder %v260, 1
    %vm263 = vmand %vm253, %vm261
    %vm264 = vmand %vm254, %vm262
    %vm265 = vmor %vm207, %vm263
    %vm266 = vmor %vm208, %vm264
    %v267 = vsel %vm253, -1.0, %v211
    %v268 = vsel %vm254, -1.0, %v212
    %v269 = vsel %vm138, %v267, -inf
    %270 = vmax.xlane.f32.xlu0 %v269
    %v271 = vpop.xlane.xlu0 %270
    %v272 = vsel %vm138, %v268, -inf
    %273 = vmax.xlane.f32.xlu0 %v272
    %v274 = vpop.xlane.xlu0 %273
    %vm275 = vcmp.eq.f32.partialorder %v267, %v271
    %vm276 = vcmp.eq.f32.partialorder %v268, %v274
    %v277 = vsel %vm275, %v166, 8
    %v278 = vsel %vm276, %v166, 8
    %v279 = vsel %vm138, %v277, 2147483647
    %v280 = vand.u32 %v279, 65535
    %v281 = vshra.s32 %v279, 16
    %v282 = vcvt.s32.f32 %v280
    %v283 = vcvt.s32.f32 %v281
    %284 = vmin.xlane.f32.xlu0 %v283
    %v285 = vpop.xlane.xlu0 %284
    %vm286 = vcmp.eq.f32.partialorder %v283, %v285
    %v287 = vsel %vm286, %v282, inf
    %288 = vmin.xlane.f32.xlu0 %v287
    %v289 = vpop.xlane.xlu0 %288
    %v290 = vcvt.f32.s32 %v289
    %v291 = vcvt.f32.s32 %v285
    %v292 = vshll.u32 %v291, 16
    %v293 = vadd.s32 %v292, %v290
    %v294 = vsel %vm138, %v278, 2147483647
    %v295 = vand.u32 %v294, 65535
    %v296 = vshra.s32 %v294, 16
    %v297 = vcvt.s32.f32 %v295
    %v298 = vcvt.s32.f32 %v296
    %299 = vmin.xlane.f32.xlu0 %v298
    %v300 = vpop.xlane.xlu0 %299
    %vm301 = vcmp.eq.f32.partialorder %v298, %v300
    %v302 = vsel %vm301, %v297, inf
    %303 = vmin.xlane.f32.xlu0 %v302
    %v304 = vpop.xlane.xlu0 %303
    %v305 = vcvt.f32.s32 %v304
    %v306 = vcvt.f32.s32 %v300
    %v307 = vshll.u32 %v306, 16
    %v308 = vadd.s32 %v307, %v305
    %vm309 = vcmp.eq.s32.totalorder %v166, %v293
    %vm310 = vcmp.eq.s32.totalorder %v166, %v308
    %v311 = vadd.f32 %v255, %v271
    %v312 = vadd.f32 %v256, %v274
    %vm313 = vcmp.le.f32.partialorder %v311, 0.5
    %vm314 = vcmp.le.f32.partialorder %v312, 0.5
    %v315 = vsel %vm313, 1, 0
    %v316 = vsel %vm314, 1, 0
    %vm317 = vcmp.eq.s32.totalorder %v315, 1
    %vm318 = vcmp.eq.s32.totalorder %v316, 1
    %vm319 = vmand %vm309, %vm317
    %vm320 = vmand %vm310, %vm318
    %vm321 = vmor %vm265, %vm319
    %vm322 = vmor %vm266, %vm320
    %v323 = vsel %vm309, -1.0, %v267
    %v324 = vsel %vm310, -1.0, %v268
    %v325 = vsel %vm138, %v323, -inf
    %326 = vmax.xlane.f32.xlu0 %v325
    %v327 = vpop.xlane.xlu0 %326
    %v328 = vsel %vm138, %v324, -inf
    %329 = vmax.xlane.f32.xlu0 %v328
    %v330 = vpop.xlane.xlu0 %329
    %vm331 = vcmp.eq.f32.partialorder %v323, %v327
    %vm332 = vcmp.eq.f32.partialorder %v324, %v330
    %v333 = vsel %vm331, %v166, 8
    %v334 = vsel %vm332, %v166, 8
    %v335 = vsel %vm138, %v333, 2147483647
    %v336 = vand.u32 %v335, 65535
    %v337 = vshra.s32 %v335, 16
    %v338 = vcvt.s32.f32 %v336
    %v339 = vcvt.s32.f32 %v337
    %340 = vmin.xlane.f32.xlu0 %v339
    %v341 = vpop.xlane.xlu0 %340
    %vm342 = vcmp.eq.f32.partialorder %v339, %v341
    %v343 = vsel %vm342, %v338, inf
    %344 = vmin.xlane.f32.xlu0 %v343
    %v345 = vpop.xlane.xlu0 %344
    %v346 = vcvt.f32.s32 %v345
    %v347 = vcvt.f32.s32 %v341
    %v348 = vshll.u32 %v347, 16
    %v349 = vadd.s32 %v348, %v346
    %v350 = vsel %vm138, %v334, 2147483647
    %v351 = vand.u32 %v350, 65535
    %v352 = vshra.s32 %v350, 16
    %v353 = vcvt.s32.f32 %v351
    %v354 = vcvt.s32.f32 %v352
    %355 = vmin.xlane.f32.xlu0 %v354
    %v356 = vpop.xlane.xlu0 %355
    %vm357 = vcmp.eq.f32.partialorder %v354, %v356
    %v358 = vsel %vm357, %v353, inf
    %359 = vmin.xlane.f32.xlu0 %v358
    %v360 = vpop.xlane.xlu0 %359
    %v361 = vcvt.f32.s32 %v360
    %v362 = vcvt.f32.s32 %v356
    %v363 = vshll.u32 %v362, 16
    %v364 = vadd.s32 %v363, %v361
    %vm365 = vcmp.eq.s32.totalorder %v166, %v349
    %vm366 = vcmp.eq.s32.totalorder %v166, %v364
    %v367 = vadd.f32 %v311, %v327
    %v368 = vadd.f32 %v312, %v330
    %vm369 = vcmp.le.f32.partialorder %v367, 0.5
    %vm370 = vcmp.le.f32.partialorder %v368, 0.5
    %v371 = vsel %vm369, 1, 0
    %v372 = vsel %vm370, 1, 0
    %vm373 = vcmp.eq.s32.totalorder %v371, 1
    %vm374 = vcmp.eq.s32.totalorder %v372, 1
    %vm375 = vmand %vm365, %vm373
    %vm376 = vmand %vm366, %vm374
    %vm377 = vmor %vm321, %vm375
    %vm378 = vmor %vm322, %vm376
    %v379 = vsel %vm365, -1.0, %v323
    %v380 = vsel %vm366, -1.0, %v324
    %v381 = vsel %vm138, %v379, -inf
    %382 = vmax.xlane.f32.xlu0 %v381
    %v383 = vpop.xlane.xlu0 %382
    %v384 = vsel %vm138, %v380, -inf
    %385 = vmax.xlane.f32.xlu0 %v384
    %v386 = vpop.xlane.xlu0 %385
    %vm387 = vcmp.eq.f32.partialorder %v379, %v383
    %vm388 = vcmp.eq.f32.partialorder %v380, %v386
    %v389 = vsel %vm387, %v166, 8
    %v390 = vsel %vm388, %v166, 8
    %v391 = vsel %vm138, %v389, 2147483647
    %v392 = vand.u32 %v391, 65535
    %v393 = vshra.s32 %v391, 16
    %v394 = vcvt.s32.f32 %v392
    %v395 = vcvt.s32.f32 %v393
    %396 = vmin.xlane.f32.xlu0 %v395
    %v397 = vpop.xlane.xlu0 %396
    %vm398 = vcmp.eq.f32.partialorder %v395, %v397
    %v399 = vsel %vm398, %v394, inf
    %400 = vmin.xlane.f32.xlu0 %v399
    %v401 = vpop.xlane.xlu0 %400
    %v402 = vcvt.f32.s32 %v401
    %v403 = vcvt.f32.s32 %v397
    %v404 = vshll.u32 %v403, 16
    %v405 = vadd.s32 %v404, %v402
    %v406 = vsel %vm138, %v390, 2147483647
    %v407 = vand.u32 %v406, 65535
    %v408 = vshra.s32 %v406, 16
    %v409 = vcvt.s32.f32 %v407
    %v410 = vcvt.s32.f32 %v408
    %411 = vmin.xlane.f32.xlu0 %v410
    %v412 = vpop.xlane.xlu0 %411
    %vm413 = vcmp.eq.f32.partialorder %v410, %v412
    %v414 = vsel %vm413, %v409, inf
    %415 = vmin.xlane.f32.xlu0 %v414
    %v416 = vpop.xlane.xlu0 %415
    %v417 = vcvt.f32.s32 %v416
    %v418 = vcvt.f32.s32 %v412
    %v419 = vshll.u32 %v418, 16
    %v420 = vadd.s32 %v419, %v417
    %vm421 = vcmp.eq.s32.totalorder %v166, %v405
    %vm422 = vcmp.eq.s32.totalorder %v166, %v420
    %v423 = vadd.f32 %v367, %v383
    %v424 = vadd.f32 %v368, %v386
    %vm425 = vcmp.le.f32.partialorder %v423, 0.5
    %vm426 = vcmp.le.f32.partialorder %v424, 0.5
    %v427 = vsel %vm425, 1, 0
    %v428 = vsel %vm426, 1, 0
    %vm429 = vcmp.eq.s32.totalorder %v427, 1
    %vm430 = vcmp.eq.s32.totalorder %v428, 1
    %vm431 = vmand %vm421, %vm429
    %vm432 = vmand %vm422, %vm430
    %vm433 = vmor %vm377, %vm431
    %vm434 = vmor %vm378, %vm432
    %v435 = vsel %vm421, -1.0, %v379
    %v436 = vsel %vm422, -1.0, %v380
    %v437 = vsel %vm138, %v435, -inf
    %438 = vmax.xlane.f32.xlu0 %v437
    %v439 = vpop.xlane.xlu0 %438
    %v440 = vsel %vm138, %v436, -inf
    %441 = vmax.xlane.f32.xlu0 %v440
    %v442 = vpop.xlane.xlu0 %441
    %vm443 = vcmp.eq.f32.partialorder %v435, %v439
    %vm444 = vcmp.eq.f32.partialorder %v436, %v442
    %v445 = vsel %vm443, %v166, 8
    %v446 = vsel %vm444, %v166, 8
    %v447 = vsel %vm138, %v445, 2147483647
    %v448 = vand.u32 %v447, 65535
    %v449 = vshra.s32 %v447, 16
    %v450 = vcvt.s32.f32 %v448
    %v451 = vcvt.s32.f32 %v449
    %452 = vmin.xlane.f32.xlu0 %v451
    %v453 = vpop.xlane.xlu0 %452
    %vm454 = vcmp.eq.f32.partialorder %v451, %v453
    %v455 = vsel %vm454, %v450, inf
    %456 = vmin.xlane.f32.xlu0 %v455
    %v457 = vpop.xlane.xlu0 %456
    %v458 = vcvt.f32.s32 %v457
    %v459 = vcvt.f32.s32 %v453
    %v460 = vshll.u32 %v459, 16
    %v461 = vadd.s32 %v460, %v458
    %v462 = vsel %vm138, %v446, 2147483647
    %v463 = vand.u32 %v462, 65535
    %v464 = vshra.s32 %v462, 16
    %v465 = vcvt.s32.f32 %v463
    %v466 = vcvt.s32.f32 %v464
    %467 = vmin.xlane.f32.xlu0 %v466
    %v468 = vpop.xlane.xlu0 %467
    %vm469 = vcmp.eq.f32.partialorder %v466, %v468
    %v470 = vsel %vm469, %v465, inf
    %471 = vmin.xlane.f32.xlu0 %v470
    %v472 = vpop.xlane.xlu0 %471
    %v473 = vcvt.f32.s32 %v472
    %v474 = vcvt.f32.s32 %v468
    %v475 = vshll.u32 %v474, 16
    %v476 = vadd.s32 %v475, %v473
    %vm477 = vcmp.eq.s32.totalorder %v166, %v461
    %vm478 = vcmp.eq.s32.totalorder %v166, %v476
    %v479 = vadd.f32 %v423, %v439
    %v480 = vadd.f32 %v424, %v442
    %vm481 = vcmp.le.f32.partialorder %v479, 0.5
    %vm482 = vcmp.le.f32.partialorder %v480, 0.5
    %v483 = vsel %vm481, 1, 0
    %v484 = vsel %vm482, 1, 0
    %vm485 = vcmp.eq.s32.totalorder %v483, 1
    %vm486 = vcmp.eq.s32.totalorder %v484, 1
    %vm487 = vmand %vm477, %vm485
    %vm488 = vmand %vm478, %vm486
    %vm489 = vmor %vm433, %vm487
    %vm490 = vmor %vm434, %vm488
    %v491 = vsel %vm477, -1.0, %v435
    %v492 = vsel %vm478, -1.0, %v436
    %v493 = vsel %vm138, %v491, -inf
    %494 = vmax.xlane.f32.xlu0 %v493
    %v495 = vpop.xlane.xlu0 %494
    %v496 = vsel %vm138, %v492, -inf
    %497 = vmax.xlane.f32.xlu0 %v496
    %v498 = vpop.xlane.xlu0 %497
    %vm499 = vcmp.eq.f32.partialorder %v491, %v495
    %vm500 = vcmp.eq.f32.partialorder %v492, %v498
    %v501 = vsel %vm499, %v166, 8
    %v502 = vsel %vm500, %v166, 8
    %v503 = vsel %vm138, %v501, 2147483647
    %v504 = vand.u32 %v503, 65535
    %v505 = vshra.s32 %v503, 16
    %v506 = vcvt.s32.f32 %v504
    %v507 = vcvt.s32.f32 %v505
    %508 = vmin.xlane.f32.xlu0 %v507
    %v509 = vpop.xlane.xlu0 %508
    %vm510 = vcmp.eq.f32.partialorder %v507, %v509
    %v511 = vsel %vm510, %v506, inf
    %512 = vmin.xlane.f32.xlu0 %v511
    %v513 = vpop.xlane.xlu0 %512
    %v514 = vcvt.f32.s32 %v513
    %v515 = vcvt.f32.s32 %v509
    %v516 = vshll.u32 %v515, 16
    %v517 = vadd.s32 %v516, %v514
    %v518 = vsel %vm138, %v502, 2147483647
    %v519 = vand.u32 %v518, 65535
    %v520 = vshra.s32 %v518, 16
    %v521 = vcvt.s32.f32 %v519
    %v522 = vcvt.s32.f32 %v520
    %523 = vmin.xlane.f32.xlu0 %v522
    %v524 = vpop.xlane.xlu0 %523
    %vm525 = vcmp.eq.f32.partialorder %v522, %v524
    %v526 = vsel %vm525, %v521, inf
    %527 = vmin.xlane.f32.xlu0 %v526
    %v528 = vpop.xlane.xlu0 %527
    %v529 = vcvt.f32.s32 %v528
    %v530 = vcvt.f32.s32 %v524
    %v531 = vshll.u32 %v530, 16
    %v532 = vadd.s32 %v531, %v529
    %vm533 = vcmp.eq.s32.totalorder %v166, %v517
    %vm534 = vcmp.eq.s32.totalorder %v166, %v532
    %v535 = vadd.f32 %v479, %v495
    %v536 = vadd.f32 %v480, %v498
    %vm537 = vcmp.le.f32.partialorder %v535, 0.5
    %vm538 = vcmp.le.f32.partialorder %v536, 0.5
    %v539 = vsel %vm537, 1, 0
    %v540 = vsel %vm538, 1, 0
    %vm541 = vcmp.eq.s32.totalorder %v539, 1
    %vm542 = vcmp.eq.s32.totalorder %v540, 1
    %vm543 = vmand %vm533, %vm541
    %vm544 = vmand %vm534, %vm542
    %vm545 = vmor %vm489, %vm543
    %vm546 = vmor %vm490, %vm544
    %v547 = vsel %vm533, -1.0, %v491
    %v548 = vsel %vm534, -1.0, %v492
    %v549 = vsel %vm138, %v547, -inf
    %550 = vmax.xlane.f32.xlu0 %v549
    %v551 = vpop.xlane.xlu0 %550
    %v552 = vsel %vm138, %v548, -inf
    %553 = vmax.xlane.f32.xlu0 %v552
    %v554 = vpop.xlane.xlu0 %553
    %vm555 = vcmp.eq.f32.partialorder %v547, %v551
    %vm556 = vcmp.eq.f32.partialorder %v548, %v554
    %v557 = vsel %vm555, %v166, 8
    %v558 = vsel %vm556, %v166, 8
    %v559 = vsel %vm138, %v557, 2147483647
    %v560 = vand.u32 %v559, 65535
    %v561 = vshra.s32 %v559, 16
    %v562 = vcvt.s32.f32 %v560
    %v563 = vcvt.s32.f32 %v561
    %564 = vmin.xlane.f32.xlu0 %v563
    %v565 = vpop.xlane.xlu0 %564
    %vm566 = vcmp.eq.f32.partialorder %v563, %v565
    %v567 = vsel %vm566, %v562, inf
    %568 = vmin.xlane.f32.xlu0 %v567
    %v569 = vpop.xlane.xlu0 %568
    %v570 = vcvt.f32.s32 %v569
    %v571 = vcvt.f32.s32 %v565
    %v572 = vshll.u32 %v571, 16
    %v573 = vadd.s32 %v572, %v570
    %v574 = vsel %vm138, %v558, 2147483647
    %v575 = vand.u32 %v574, 65535
    %v576 = vshra.s32 %v574, 16
    %v577 = vcvt.s32.f32 %v575
    %v578 = vcvt.s32.f32 %v576
    %579 = vmin.xlane.f32.xlu0 %v578
    %v580 = vpop.xlane.xlu0 %579
    %vm581 = vcmp.eq.f32.partialorder %v578, %v580
    %v582 = vsel %vm581, %v577, inf
    %583 = vmin.xlane.f32.xlu0 %v582
    %v584 = vpop.xlane.xlu0 %583
    %v585 = vcvt.f32.s32 %v584
    %v586 = vcvt.f32.s32 %v580
    %v587 = vshll.u32 %v586, 16
    %v588 = vadd.s32 %v587, %v585
    %vm589 = vcmp.eq.s32.totalorder %v166, %v573
    %vm590 = vcmp.eq.s32.totalorder %v166, %v588
    %v591 = vadd.f32 %v535, %v551
    %v592 = vadd.f32 %v536, %v554
    %vm593 = vcmp.le.f32.partialorder %v591, 0.5
    %vm594 = vcmp.le.f32.partialorder %v592, 0.5
    %v595 = vsel %vm593, 1, 0
    %v596 = vsel %vm594, 1, 0
    %vm597 = vcmp.eq.s32.totalorder %v595, 1
    %vm598 = vcmp.eq.s32.totalorder %v596, 1
    %vm599 = vmand %vm589, %vm597
    %vm600 = vmand %vm590, %vm598
    %vm601 = vmor %vm545, %vm599
    %vm602 = vmor %vm546, %vm600
    %v603 = vsel %vm601, 1, 0
    %v604 = vsel %vm602, 1, 0
    %605 = vst.msk [vmem:[%s5] sm:$0xff] %vm138, %v603
    %606 = vst.msk [vmem:[%s5 + $0x8] sm:$0xff] %vm138, %v604
    // Predicated region
    $region22: #{tpu_custom_call.1} parent=1 // pred_check
      _
    $region23: #{tpu_custom_call.1} parent=1 // pred_check_branch
      %608 = sbr.rel (0) target = $region25
    $region24: #{tpu_custom_call.1} parent=1 // pred_region
      _
    $region25: #{tpu_custom_call.1} parent=1 // pred_fallthru
      _
    // Predicated region
    $region26: #{tpu_custom_call.1} parent=1 // pred_check
      _
    $region27: #{tpu_custom_call.1} parent=1 // pred_check_branch
      %610 = sbr.rel (0) target = $region29
    $region28: #{tpu_custom_call.1} parent=1 // pred_region
      _
    $region29: #{tpu_custom_call.1} parent=1 // pred_fallthru
      _
    // Predicated region
    $region30: #{tpu_custom_call.1} parent=1 // pred_check
      _
    $region31: #{tpu_custom_call.1} parent=1 // pred_check_branch
      %612 = sbr.rel (0) target = $region33
    $region32: #{tpu_custom_call.1} parent=1 // pred_region
      _
    $region33: #{tpu_custom_call.1} parent=1 // pred_fallthru
      _
    // Predicated region
    $region34: #{tpu_custom_call.1} parent=1 // pred_check
      _
    $region35: #{tpu_custom_call.1} parent=1 // pred_check_branch
      %614 = sbr.rel (0) target = $region37
    $region36: #{tpu_custom_call.1} parent=1 // pred_region
      _
    $region37: #{tpu_custom_call.1} parent=1 // pred_fallthru
      _
    // Predicated region
    $region38: #{tpu_custom_call.1} parent=1 // pred_check
      _
    $region39: #{tpu_custom_call.1} parent=1 // pred_check_branch
      %616 = sbr.rel (0) target = $region41
    $region40: #{tpu_custom_call.1} parent=1 // pred_region
      _
    $region41: #{tpu_custom_call.1} parent=1 // pred_fallthru
      _
    // Predicated region
    $region42: #{tpu_custom_call.1} parent=1 // pred_check
      _
    $region43: #{tpu_custom_call.1} parent=1 // pred_check_branch
      %618 = sbr.rel (0) target = $region45
    $region44: #{tpu_custom_call.1} parent=1 // pred_region
      _
    $region45: #{tpu_custom_call.1} parent=1 // pred_fallthru
      _
    %619 = vsyncpa [#allocation3], 1
    %620 = vsyncpa [#allocation5], 1

</llo_original>
